<compile_context>
chip_gen: v5e
topology: v5e:2x2
jax: 0.10.0
libtpu: 0.0.40
codegen_flags: <defaults>
</compile_context>

<pallas_src>
import jax
import jax.numpy as jnp
from jax.experimental import pallas as pl
from jax.experimental.pallas import tpu as pltpu


# ---------------------------------------------------------------------------
# Kernels
# ---------------------------------------------------------------------------

def _feat_kernel(x_ref, w1_ref, w3_ref, xw1_ref, xw3_ref):
    """Per row-tile: XW1 = X @ W1, XW3 = X @ W3 (skip path), reusing the X tile."""
    x = x_ref[...]
    xw1_ref[...] = jnp.dot(
        x, w1_ref[...], preferred_element_type=jnp.float32
    ).astype(xw1_ref.dtype)
    xw3_ref[...] = jnp.dot(
        x, w3_ref[...], preferred_element_type=jnp.float32
    ).astype(xw3_ref.dtype)


def _agg1_kernel(a_ref, xw1_ref, w2_ref, z_ref, acc_ref):
    """Z = relu(Ahat @ XW1) @ W2, K-reduction over Ahat column tiles."""
    k = pl.program_id(1)

    @pl.when(k == 0)
    def _():
        acc_ref[...] = jnp.zeros_like(acc_ref)

    acc_ref[...] += jnp.dot(
        a_ref[...], xw1_ref[...], preferred_element_type=jnp.float32
    )

    @pl.when(k == pl.num_programs(1) - 1)
    def _():
        l1 = jnp.maximum(acc_ref[...], 0.0).astype(z_ref.dtype)
        z_ref[...] = jnp.dot(
            l1, w2_ref[...], preferred_element_type=jnp.float32
        ).astype(z_ref.dtype)


def _agg2_kernel(a_ref, z_ref, xw3_ref, out_ref, acc_ref):
    """out = relu(Ahat @ Z + XW3), K-reduction over Ahat column tiles."""
    k = pl.program_id(1)

    @pl.when(k == 0)
    def _():
        acc_ref[...] = jnp.zeros_like(acc_ref)

    acc_ref[...] += jnp.dot(
        a_ref[...], z_ref[...], preferred_element_type=jnp.float32
    )

    @pl.when(k == pl.num_programs(1) - 1)
    def _():
        out_ref[...] = jnp.maximum(
            acc_ref[...] + xw3_ref[...].astype(jnp.float32), 0.0
        ).astype(out_ref.dtype)


# ---------------------------------------------------------------------------
# Wrapper
# ---------------------------------------------------------------------------

def _round_up(v, m):
    return (v + m - 1) // m * m


def _pad2(a, rows, cols):
    return jnp.pad(a, ((0, rows - a.shape[0]), (0, cols - a.shape[1])))


def sp_skip_gcn(ahat, x, w1, w2, w3, *, tm=256, tk=256):
    """Forward pass of Sp_Skip_GCN (ReLU activation), f32 inputs, f32 output."""
    n, f = x.shape
    h1 = w1.shape[1]
    h2 = w2.shape[1]
    assert ahat.shape == (n, n)
    assert w2.shape == (h1, h2)
    assert w3.shape == (f, h2)

    lane = 128
    cdt = jnp.bfloat16  # MXU-facing dtype; accumulation stays f32

    # Pad node dim to the tile grid, feature/hidden dims to lane density (128).
    np_ = _round_up(_round_up(n, tm), tk)
    fp = _round_up(f, lane)
    h1p = _round_up(h1, lane)
    h2p = _round_up(h2, lane)

    a_p = _pad2(ahat, np_, np_).astype(cdt)
    x_p = _pad2(x, np_, fp).astype(cdt)
    w1_p = _pad2(w1, fp, h1p).astype(cdt)
    w2_p = _pad2(w2, h1p, h2p).astype(cdt)
    w3_p = _pad2(w3, fp, h2p).astype(cdt)

    grid_rows = np_ // tm
    grid_k = np_ // tk

    # ---- Phase 1: XW1, XW3 (one pass over X, row-tiled, pipelined) ----------
    xw1, xw3 = pl.pallas_call(
        _feat_kernel,
        grid=(grid_rows,),
        out_shape=(
            jax.ShapeDtypeStruct((np_, h1p), cdt),
            jax.ShapeDtypeStruct((np_, h2p), cdt),
        ),
        in_specs=[
            pl.BlockSpec((tm, fp), lambda i: (i, 0)),   # X row tile
            pl.BlockSpec((fp, h1p), lambda i: (0, 0)),  # W1 (resident)
            pl.BlockSpec((fp, h2p), lambda i: (0, 0)),  # W3 (resident)
        ],
        out_specs=(
            pl.BlockSpec((tm, h1p), lambda i: (i, 0)),
            pl.BlockSpec((tm, h2p), lambda i: (i, 0)),
        ),
        compiler_params=pltpu.CompilerParams(
            dimension_semantics=("parallel",)
        ),
    )(x_p, w1_p, w3_p)

    # ---- Phase 2: Z = relu(Ahat @ XW1) @ W2 ---------------------------------
    z = pl.pallas_call(
        _agg1_kernel,
        grid=(grid_rows, grid_k),
        out_shape=jax.ShapeDtypeStruct((np_, h2p), cdt),
        in_specs=[
            pl.BlockSpec((tm, tk), lambda i, k: (i, k)),    # Ahat tile
            pl.BlockSpec((tk, h1p), lambda i, k: (k, 0)),   # XW1 K-slab
            pl.BlockSpec((h1p, h2p), lambda i, k: (0, 0)),  # W2 (resident)
        ],
        out_specs=pl.BlockSpec((tm, h2p), lambda i, k: (i, 0)),
        scratch_shapes=[pltpu.VMEM((tm, h1p), jnp.float32)],
        compiler_params=pltpu.CompilerParams(
            dimension_semantics=("parallel", "arbitrary")
        ),
    )(a_p, xw1, w2_p)

    # ---- Phase 3: out = relu(Ahat @ Z + XW3) --------------------------------
    out = pl.pallas_call(
        _agg2_kernel,
        grid=(grid_rows, grid_k),
        out_shape=jax.ShapeDtypeStruct((np_, h2p), jnp.float32),
        in_specs=[
            pl.BlockSpec((tm, tk), lambda i, k: (i, k)),   # Ahat tile
            pl.BlockSpec((tk, h2p), lambda i, k: (k, 0)),  # Z K-slab
            pl.BlockSpec((tm, h2p), lambda i, k: (i, 0)),  # skip (XW3) row tile
        ],
        out_specs=pl.BlockSpec((tm, h2p), lambda i, k: (i, 0)),
        scratch_shapes=[pltpu.VMEM((tm, h2p), jnp.float32)],
        compiler_params=pltpu.CompilerParams(
            dimension_semantics=("parallel", "arbitrary")
        ),
    )(a_p, z, xw3)

    return out[:n, :h2]


# ---------------------------------------------------------------------------
# Demo / correctness check
# ---------------------------------------------------------------------------

def _glorot(key, shape):
    # Mimics u.reset_param (uniform Xavier-style init), deterministic.
    stdv = 1.0 / jnp.sqrt(jnp.float32(shape[0]))
    return jax.random.uniform(key, shape, jnp.float32, -stdv, stdv)


if __name__ == "__main__":
    # N nodes, F feats_per_node, H1 = layer_1_feats, H2 = layer_2_feats.
    # (Skip connection in the PyTorch class requires H1 == H2.)
    # N and F deliberately non-multiples of the tile sizes to exercise padding.
    N, F, H1, H2 = 384, 96, 128, 128

    key = jax.random.PRNGKey(0)
    k_a, k_x, k_w1, k_w2, k_w3 = jax.random.split(key, 5)

    # Dense "Ahat": random adjacency with self-loops, row-normalized.
    adj = (jax.random.uniform(k_a, (N, N)) < 0.05).astype(jnp.float32)
    adj = adj + jnp.eye(N, dtype=jnp.float32)
    ahat = adj / jnp.sum(adj, axis=1, keepdims=True)

    x = jax.random.normal(k_x, (N, F), jnp.float32)
    w1 = _glorot(k_w1, (F, H1))
    w2 = _glorot(k_w2, (H1, H2))
    w3 = _glorot(k_w3, (F, H2))  # skip weight (W_feat)

    out = sp_skip_gcn(ahat, x, w1, w2, w3)
    out = jax.block_until_ready(out)
    assert out.shape == (N, H2)

    # Reference 1: same dtype discipline as the kernel (bf16 MXU inputs,
    # f32 accumulation, bf16 intermediates) -> tight tolerance.
    bf = jnp.bfloat16
    a16, x16 = ahat.astype(bf), x.astype(bf)
    w1b, w2b, w3b = w1.astype(bf), w2.astype(bf), w3.astype(bf)
    xw1_r = jnp.dot(x16, w1b, preferred_element_type=jnp.float32).astype(bf)
    xw3_r = jnp.dot(x16, w3b, preferred_element_type=jnp.float32).astype(bf)
    l1_r = jnp.maximum(jnp.dot(a16, xw1_r, preferred_element_type=jnp.float32), 0.0)
    z_r = jnp.dot(l1_r.astype(bf), w2b, preferred_element_type=jnp.float32).astype(bf)
    ref_bf16 = jnp.maximum(
        jnp.dot(a16, z_r, preferred_element_type=jnp.float32)
        + xw3_r.astype(jnp.float32),
        0.0,
    )
    assert jnp.allclose(out, ref_bf16, atol=1e-2, rtol=1e-2)

    # Reference 2: pure f32 math (the exact PyTorch forward) -> loose tolerance
    # (only difference is bf16 rounding of MXU inputs).
    l1_f32 = jnp.maximum(ahat @ (x @ w1), 0.0)
    ref_f32 = jnp.maximum(ahat @ (l1_f32 @ w2) + x @ w3, 0.0)
    assert jnp.allclose(out, ref_f32, atol=1e-1, rtol=1e-1)

    print("KERNEL_OK")
</pallas_src>

<mosaic_0001>
module attributes {stable_mosaic.version = 11 : i64} {
  func.func @_feat_kernel(%arg0: i32, %arg1: memref<256x128xbf16, #tpu.memory_space<vmem>>, %arg2: memref<128x128xbf16, #tpu.memory_space<vmem>>, %arg3: memref<128x128xbf16, #tpu.memory_space<vmem>>, %arg4: memref<256x128xbf16, #tpu.memory_space<vmem>>, %arg5: memref<256x128xbf16, #tpu.memory_space<vmem>>) attributes {dimension_semantics = [#tpu.dimension_semantics<parallel>], iteration_bounds = array<i64: 2>, scalar_prefetch = 0 : i64, scratch_operands = 0 : i64, tpu.core_type = #tpu.core_type<tc>, window_params = [{transform_indices = @transform_0, window_bounds = array<i64: 256, 128>}, {pipeline_mode = #tpu.pipeline_mode<synchronous>, transform_indices = @transform_1, window_bounds = array<i64: 128, 128>}, {pipeline_mode = #tpu.pipeline_mode<synchronous>, transform_indices = @transform_2, window_bounds = array<i64: 128, 128>}, {transform_indices = @transform_3, window_bounds = array<i64: 256, 128>}, {transform_indices = @transform_4, window_bounds = array<i64: 256, 128>}]} {
    %c0 = arith.constant 0 : index
    %c0_0 = arith.constant 0 : index
    %0 = vector.load %arg1[%c0, %c0_0] : memref<256x128xbf16, #tpu.memory_space<vmem>>, vector<256x128xbf16>
    %c0_1 = arith.constant 0 : index
    %c0_2 = arith.constant 0 : index
    %1 = vector.load %arg2[%c0_1, %c0_2] : memref<128x128xbf16, #tpu.memory_space<vmem>>, vector<128x128xbf16>
    %cst = arith.constant dense<0.000000e+00> : vector<256x128xf32>
    %2 = tpu.matmul %0, %1, %cst {dimension_numbers = #tpu.dot_dimension_numbers<[1], [0], [0], [1], [0, 0, 1, 1], [], []>} : vector<256x128xbf16>, vector<128x128xbf16>, vector<256x128xf32> -> vector<256x128xf32>
    %3 = arith.truncf %2 : vector<256x128xf32> to vector<256x128xbf16>
    %c0_3 = arith.constant 0 : index
    %c0_4 = arith.constant 0 : index
    %4 = vector.load %arg4[%c0_3, %c0_4] : memref<256x128xbf16, #tpu.memory_space<vmem>>, vector<256x128xbf16>
    tpu.vector_store %arg4[%c0_3, %c0_4], %3 {strides = array<i32>} : memref<256x128xbf16, #tpu.memory_space<vmem>>, vector<256x128xbf16>,
    %c0_5 = arith.constant 0 : index
    %c0_6 = arith.constant 0 : index
    %5 = vector.load %arg3[%c0_5, %c0_6] : memref<128x128xbf16, #tpu.memory_space<vmem>>, vector<128x128xbf16>
    %cst_7 = arith.constant dense<0.000000e+00> : vector<256x128xf32>
    %6 = tpu.matmul %0, %5, %cst_7 {dimension_numbers = #tpu.dot_dimension_numbers<[1], [0], [0], [1], [0, 0, 1, 1], [], []>} : vector<256x128xbf16>, vector<128x128xbf16>, vector<256x128xf32> -> vector<256x128xf32>
    %7 = arith.truncf %6 : vector<256x128xf32> to vector<256x128xbf16>
    %c0_8 = arith.constant 0 : index
    %c0_9 = arith.constant 0 : index
    %8 = vector.load %arg5[%c0_8, %c0_9] : memref<256x128xbf16, #tpu.memory_space<vmem>>, vector<256x128xbf16>
    tpu.vector_store %arg5[%c0_8, %c0_9], %7 {strides = array<i32>} : memref<256x128xbf16, #tpu.memory_space<vmem>>, vector<256x128xbf16>,
    return
  }
  func.func @transform_0(%arg0: i32) -> (i32, i32) {
    %c0_i32 = arith.constant 0 : i32
    %c0_i32_0 = arith.constant 0 : i32
    return %arg0, %c0_i32 : i32, i32
  }
  func.func @transform_1(%arg0: i32) -> (i32, i32) {
    %c0_i32 = arith.constant 0 : i32
    %c0_i32_0 = arith.constant 0 : i32
    %c0_i32_1 = arith.constant 0 : i32
    return %c0_i32, %c0_i32_0 : i32, i32
  }
  func.func @transform_2(%arg0: i32) -> (i32, i32) {
    %c0_i32 = arith.constant 0 : i32
    %c0_i32_0 = arith.constant 0 : i32
    %c0_i32_1 = arith.constant 0 : i32
    return %c0_i32, %c0_i32_0 : i32, i32
  }
  func.func @transform_3(%arg0: i32) -> (i32, i32) {
    %c0_i32 = arith.constant 0 : i32
    %c0_i32_0 = arith.constant 0 : i32
    return %arg0, %c0_i32 : i32, i32
  }
  func.func @transform_4(%arg0: i32) -> (i32, i32) {
    %c0_i32 = arith.constant 0 : i32
    %c0_i32_0 = arith.constant 0 : i32
    return %arg0, %c0_i32 : i32, i32
  }
}

</mosaic_0001>

<llo_original>
// kernel: tpu_custom_call.1
$region0: #{tpu_custom_call.1}
  #allocation0 [shape = 'u32[]', space=smem, size = 0x4, offset = 0x4, fixed_abs, tag = 'smem constant byte address 0x4 - core index']
  #allocation1 [shape = 'u32[72,128]{1,0:T(1,128)}', space=vmem, size = 0x9000, scoped, tag = 'internal scratch']
  %s0 = inlined_call_operand.hbm [shape: bf16[512,128], index: 0, kind: input, shape index: {}]
  %s1 = inlined_call_operand.hbm [shape: bf16[128,128], index: 1, kind: input, shape index: {}]
  %s2 = inlined_call_operand.hbm [shape: bf16[128,128], index: 2, kind: input, shape index: {}]
  %s3 = inlined_call_operand.hbm [shape: bf16[512,128], index: 3, kind: output, shape index: {0}]
  %s4 = inlined_call_operand.hbm [shape: bf16[512,128], index: 4, kind: output, shape index: {1}]
  %5 = xla_tuple %s3, %s4
  %s6 = sld [smem:[#allocation0]]
  $region65: #{tpu_custom_call.1} parent=0
    _
  %s8 = ssub.s32 1, %s6
  %s9 = scalar_select 0, %s8, %s6
  $region1: #{tpu_custom_call.1} parent=0
    #allocation2 [shape = 'u8[131072]{0}', space=vmem, size = 0x20000, scoped, tag = 'input window, operand 0']
    #allocation3 [shape = 's32[2]{0}', space=sflag, size = 0x8, scoped, tag = 'scoped memory for tpu_custom_call.1']
    #allocation4 [shape = 's32[2]{0}', space=sflag, size = 0x8, scoped, tag = 'scoped memory for tpu_custom_call.1']
    #allocation5 [shape = 'u8[32768]{0}', space=vmem, size = 0x8000, scoped, tag = 'input window, operand 1, single buffered']
    #allocation6 [shape = 's32[1]{0}', space=sflag, size = 0x4, scoped, tag = 'scoped memory for tpu_custom_call.1']
    #allocation7 [shape = 'u8[32768]{0}', space=vmem, size = 0x8000, scoped, tag = 'input window, operand 2, single buffered']
    #allocation8 [shape = 'u8[131072]{0}', space=vmem, size = 0x20000, scoped, tag = 'output window, operand 0']
    #allocation9 [shape = 'u8[131072]{0}', space=vmem, size = 0x20000, scoped, tag = 'output window, operand 1']
    #allocation10 [shape = 's32[2]{0}', space=sflag, size = 0x8, scoped, tag = 'scoped memory for tpu_custom_call.1']
    %10 = vsyncpa [#allocation3], 0
    %s11 = scalar_lea.sflag [#allocation3], 1
    %12 = vsyncpa %s11, 0
    %13 = vsyncpa [#allocation6], 0
    %14 = vsyncpa [#allocation4], 0
    %s15 = scalar_lea.sflag [#allocation4], 1
    %16 = vsyncpa %s15, 0
    %17 = vsyncpa [#allocation10], 0
    %s18 = scalar_lea.sflag [#allocation10], 1
    %19 = vsyncpa %s18, 0
    loop: start=0, step=1, limit=4
    $region2: #{tpu_custom_call.1} parent=1 // loop_pre_header
      _
    $region3: #{tpu_custom_call.1} parent=1 // loop_header
      %s21 = sphi 0, %s25
      %p22 = scmp.ge.s32.totalorder %s21, 4
      %s31 = sphi 0, %s33
      %s34 = sphi 0, %s31
      %s35 = sphi 0, %s34
      %s51 = sphi 0, %s35
      %s55 = sphi 0, %s55
      %s57 = sphi 0, %s55
      %s58 = sphi 0, %s57
      %s72 = sphi 0, %s58
      %s76 = sphi 0, %s76
      %s78 = sphi 0, %s76
      %s79 = sphi 0, %s78
      %s93 = sphi 0, %s79
      %s99 = sphi 0, %s101
      %s102 = sphi 0, %s99
      %s103 = sphi 0, %s102
      %s119 = sphi 0, %s103
      %s125 = sphi 0, %s127
      %s128 = sphi 0, %s125
      %s129 = sphi 0, %s128
      %s145 = sphi 0, %s129
    $region4: #{tpu_custom_call.1} parent=1 // loop_header_branch
      %24 = sbr.rel (%p22) target = $region8
    $region5: #{tpu_custom_call.1} parent=1 // loop_body
      %s26 = ssub.s32 %s21, 1
      %s27 = ssub.s32 %s21, 2
      %s28 = sadd.s32 %s21, 1
      %s29 = ssub.s32 %s21, %s28
      %p30 = scmp.eq.s32.totalorder %s29, 0
      %s32 = sadd.s32 %s31, 1
      %s33 = scalar_select %p30, %s31, %s32
      %p36 = pneg %p30
      %p37 = scmp.eq.s32.totalorder %s21, 1
      %p38 = por %p36, %p37
      %p39 = scmp.ne.s32.totalorder %s31, %s34
      %p40 = scmp.eq.s32.totalorder %s21, 0
      %p41 = por %p39, %p40
      %p42 = scmp.ne.s32.totalorder %s31, %s34
      %p43 = scmp.eq.s32.totalorder %s26, 1
      %p44 = por %p42, %p43
      %p45 = scmp.ne.s32.totalorder %s34, %s35
      %p46 = scmp.eq.s32.totalorder %s26, 0
      %p47 = por %p45, %p46
      %p48 = scmp.ne.s32.totalorder %s34, %s35
      %p49 = scmp.eq.s32.totalorder %s27, 1
      %p50 = por %p48, %p49
      %p52 = scmp.ne.s32.totalorder %s35, %s51
      %p53 = scmp.eq.s32.totalorder %s27, 0
      %p54 = por %p52, %p53
      %s56 = sadd.s32 %s55, 1
      %p59 = scmp.eq.s32.totalorder %s21, 1
      %p60 = scmp.ne.s32.totalorder %s55, %s57
      %p61 = scmp.eq.s32.totalorder %s21, 0
      %p62 = por %p60, %p61
      %p63 = scmp.ne.s32.totalorder %s55, %s57
      %p64 = scmp.eq.s32.totalorder %s26, 1
      %p65 = por %p63, %p64
      %p66 = scmp.ne.s32.totalorder %s57, %s58
      %p67 = scmp.eq.s32.totalorder %s26, 0
      %p68 = por %p66, %p67
      %p69 = scmp.ne.s32.totalorder %s57, %s58
      %p70 = scmp.eq.s32.totalorder %s27, 1
      %p71 = por %p69, %p70
      %p73 = scmp.ne.s32.totalorder %s58, %s72
      %p74 = scmp.eq.s32.totalorder %s27, 0
      %p75 = por %p73, %p74
      %s77 = sadd.s32 %s76, 1
      %p80 = scmp.eq.s32.totalorder %s21, 1
      %p81 = scmp.ne.s32.totalorder %s76, %s78
      %p82 = scmp.eq.s32.totalorder %s21, 0
      %p83 = por %p81, %p82
      %p84 = scmp.ne.s32.totalorder %s76, %s78
      %p85 = scmp.eq.s32.totalorder %s26, 1
      %p86 = por %p84, %p85
      %p87 = scmp.ne.s32.totalorder %s78, %s79
      %p88 = scmp.eq.s32.totalorder %s26, 0
      %p89 = por %p87, %p88
      %p90 = scmp.ne.s32.totalorder %s78, %s79
      %p91 = scmp.eq.s32.totalorder %s27, 1
      %p92 = por %p90, %p91
      %p94 = scmp.ne.s32.totalorder %s79, %s93
      %p95 = scmp.eq.s32.totalorder %s27, 0
      %p96 = por %p94, %p95
      %s97 = ssub.s32 %s21, %s28
      %p98 = scmp.eq.s32.totalorder %s97, 0
      %s100 = sadd.s32 %s99, 1
      %s101 = scalar_select %p98, %s99, %s100
      %p104 = pneg %p98
      %p105 = scmp.eq.s32.totalorder %s21, 1
      %p106 = por %p104, %p105
      %p107 = scmp.ne.s32.totalorder %s99, %s102
      %p108 = scmp.eq.s32.totalorder %s21, 0
      %p109 = por %p107, %p108
      %p110 = scmp.ne.s32.totalorder %s99, %s102
      %p111 = scmp.eq.s32.totalorder %s26, 1
      %p112 = por %p110, %p111
      %p113 = scmp.ne.s32.totalorder %s102, %s103
      %p114 = scmp.eq.s32.totalorder %s26, 0
      %p115 = por %p113, %p114
      %p116 = scmp.ne.s32.totalorder %s102, %s103
      %p117 = scmp.eq.s32.totalorder %s27, 1
      %p118 = por %p116, %p117
      %p120 = scmp.ne.s32.totalorder %s103, %s119
      %p121 = scmp.eq.s32.totalorder %s27, 0
      %p122 = por %p120, %p121
      %s123 = ssub.s32 %s21, %s28
      %p124 = scmp.eq.s32.totalorder %s123, 0
      %s126 = sadd.s32 %s125, 1
      %s127 = scalar_select %p124, %s125, %s126
      %p130 = pneg %p124
      %p131 = scmp.eq.s32.totalorder %s21, 1
      %p132 = por %p130, %p131
      %p133 = scmp.ne.s32.totalorder %s125, %s128
      %p134 = scmp.eq.s32.totalorder %s21, 0
      %p135 = por %p133, %p134
      %p136 = scmp.ne.s32.totalorder %s125, %s128
      %p137 = scmp.eq.s32.totalorder %s26, 1
      %p138 = por %p136, %p137
      %p139 = scmp.ne.s32.totalorder %s128, %s129
      %p140 = scmp.eq.s32.totalorder %s26, 0
      %p141 = por %p139, %p140
      %p142 = scmp.ne.s32.totalorder %s128, %s129
      %p143 = scmp.eq.s32.totalorder %s27, 1
      %p144 = por %p142, %p143
      %p146 = scmp.ne.s32.totalorder %s129, %s145
      %p147 = scmp.eq.s32.totalorder %s27, 0
      %p148 = por %p146, %p147
      %p149 = scmp.le.s32.totalorder 1, %s21
      %p150 = scmp.lt.s32.totalorder %s21, 3
      %p151 = pnand %p149, %p150
      %p152 = pneg %p151
      // Predicated region
      $region9: #{tpu_custom_call.1} parent=5 // pred_check
        _
      $region10: #{tpu_custom_call.1} parent=5 // pred_check_branch
        %154 = sbr.rel (%p151) target = $region12
      $region11: #{tpu_custom_call.1} parent=5 // pred_region
        %s155 = ssub.s32 %s21, 1
        // Predicated region
        $region13: #{tpu_custom_call.1} parent=11 // pred_check
          %p156 = pneg %p68
        $region14: #{tpu_custom_call.1} parent=11 // pred_check_branch
          %158 = sbr.rel (%p156) target = $region16
        $region15: #{tpu_custom_call.1} parent=11 // pred_region
          %160 = vsyncadd [#allocation6], 0
          %s161 = sshll.u32 %s1, 4
          %s162 = int_to_ptr.hbm [resolvable:$true] %s161
          %s163 = sshll.u32 [#allocation5], 4
          %s164 = int_to_ptr.vmem [resolvable:$true] %s163
          %169 = dma.hbm_to_vmem [thread:$0]  %s162, 1024, %s164, [#allocation6], 64, 64, 4
        $region16: #{tpu_custom_call.1} parent=11 // pred_fallthru
          _
        // Predicated region
        $region17: #{tpu_custom_call.1} parent=11 // pred_check
          %p170 = pneg %p89
        $region18: #{tpu_custom_call.1} parent=11 // pred_check_branch
          %172 = sbr.rel (%p170) target = $region20
        $region19: #{tpu_custom_call.1} parent=11 // pred_region
          %174 = vsyncadd [#allocation6], 0
          %s175 = sshll.u32 %s2, 4
          %s176 = int_to_ptr.hbm [resolvable:$true] %s175
          %s177 = sshll.u32 [#allocation7], 4
          %s178 = int_to_ptr.vmem [resolvable:$true] %s177
          %183 = dma.hbm_to_vmem [thread:$0]  %s176, 1024, %s178, [#allocation6], 64, 64, 4
        $region20: #{tpu_custom_call.1} parent=11 // pred_fallthru
          _
      $region12: #{tpu_custom_call.1} parent=5 // pred_fallthru
        _
      %p184 = scmp.lt.s32.totalorder %s21, 2
      // Predicated region
      $region21: #{tpu_custom_call.1} parent=5 // pred_check
        %p185 = pneg %p184
      $region22: #{tpu_custom_call.1} parent=5 // pred_check_branch
        %187 = sbr.rel (%p185) target = $region24
      $region23: #{tpu_custom_call.1} parent=5 // pred_region
        // Predicated region
        $region25: #{tpu_custom_call.1} parent=23 // pred_check
          %p188 = pneg %p41
        $region26: #{tpu_custom_call.1} parent=23 // pred_check_branch
          %190 = sbr.rel (%p188) target = $region28
        $region27: #{tpu_custom_call.1} parent=23 // pred_region
          %s191 = sand.u32 %s31, 1
          %s192 = scalar_lea.sflag [#allocation3], %s191
          %s193 = sand.u32 %s31, 1
          %s194 = smul.addr %s193, 128
          %s195 = scalar_lea.vmem [#allocation2], %s194
          %s196 = smul.u32 32, %s21
          %198 = vsyncadd %s192, 0
          %s199 = smul.addr %s196, 4
          %s200 = scalar_lea.hbm %s0, %s199
          %s201 = sshll.u32 %s200, 4
          %s202 = int_to_ptr.hbm [resolvable:$true] %s201
          %s203 = sshll.u32 %s195, 4
          %s204 = int_to_ptr.vmem [resolvable:$true] %s203
          %209 = dma.hbm_to_vmem [thread:$0]  %s202, 2048, %s204, %s192, 64, 64, 4
        $region28: #{tpu_custom_call.1} parent=23 // pred_fallthru
          _
      $region24: #{tpu_custom_call.1} parent=5 // pred_fallthru
        _
      %p210 = scmp.le.s32.totalorder 1, %s21
      %p211 = scmp.lt.s32.totalorder %s21, 3
      %p212 = pnand %p210, %p211
      %p213 = pneg %p212
      // Predicated region
      $region29: #{tpu_custom_call.1} parent=5 // pred_check
        _
      $region30: #{tpu_custom_call.1} parent=5 // pred_check_branch
        %215 = sbr.rel (%p212) target = $region32
      $region31: #{tpu_custom_call.1} parent=5 // pred_region
        %s216 = ssub.s32 %s21, 1
        %s217 = sand.u32 %s34, 1
        %s218 = scalar_lea.sflag [#allocation3], %s217
        %s219 = sand.u32 %s34, 1
        %s220 = smul.addr %s219, 128
        %s221 = scalar_lea.vmem [#allocation2], %s220
        // Predicated region
        $region33: #{tpu_custom_call.1} parent=31 // pred_check
          %p222 = pneg %p47
        $region34: #{tpu_custom_call.1} parent=31 // pred_check_branch
          %224 = sbr.rel (%p222) target = $region36
        $region35: #{tpu_custom_call.1} parent=31 // pred_region
          %226 = dma.done %s218, 2048
        $region36: #{tpu_custom_call.1} parent=31 // pred_fallthru
          _
        // Predicated region
        $region37: #{tpu_custom_call.1} parent=31 // pred_check
          %p227 = pneg %p68
        $region38: #{tpu_custom_call.1} parent=31 // pred_check_branch
          %229 = sbr.rel (%p227) target = $region40
        $region39: #{tpu_custom_call.1} parent=31 // pred_region
          %231 = dma.done [#allocation6], 1024
        $region40: #{tpu_custom_call.1} parent=31 // pred_fallthru
          _
        // Predicated region
        $region41: #{tpu_custom_call.1} parent=31 // pred_check
          %p232 = pneg %p89
        $region42: #{tpu_custom_call.1} parent=31 // pred_check_branch
          %234 = sbr.rel (%p232) target = $region44
        $region43: #{tpu_custom_call.1} parent=31 // pred_region
          %236 = dma.done [#allocation6], 1024
        $region44: #{tpu_custom_call.1} parent=31 // pred_fallthru
          _
        %s237 = sand.u32 %s34, 1
        %s238 = scalar_lea.sflag [#allocation3], %s237
        %s239 = sand.u32 %s34, 1
        %s240 = smul.addr %s239, 128
        %s241 = scalar_lea.vmem [#allocation2], %s240
        %p242 = pneg %p47
        %p243 = pneg %p44
        %p244 = pneg %p68
        %p245 = pneg %p65
        %p246 = pneg %p89
        %p247 = pneg %p86
        %p248 = pneg %p115
        %p249 = pneg %p112
        %s250 = sand.u32 %s102, 1
        %s251 = scalar_lea.sflag [#allocation4], %s250
        %s252 = sand.u32 %s102, 1
        %s253 = smul.addr %s252, 128
        %s254 = scalar_lea.vmem [#allocation8], %s253
        %p255 = pneg %p141
        %p256 = pneg %p138
        %s257 = sand.u32 %s128, 1
        %s258 = scalar_lea.sflag [#allocation10], %s257
        %s259 = sand.u32 %s128, 1
        %s260 = smul.addr %s259, 128
        %s261 = scalar_lea.vmem [#allocation9], %s260
        %s262 = smul.u32 32, %s26
        %s263 = smul.u32 32, %s26
        %s264 = smul.u32 32, %s26
        %v265 = vld [vmem:[%s221] sm:$0xf]
        %v266 = vld [vmem:[%s221 + $0x4] sm:$0xf]
        %v267 = vld [vmem:[%s221 + $0x8] sm:$0xf]
        %v268 = vld [vmem:[%s221 + $0xc] sm:$0xf]
        %v269 = vld [vmem:[%s221 + $0x10] sm:$0xf]
        %v270 = vld [vmem:[%s221 + $0x14] sm:$0xf]
        %v271 = vld [vmem:[%s221 + $0x18] sm:$0xf]
        %v272 = vld [vmem:[%s221 + $0x1c] sm:$0xf]
        %v273 = vld [vmem:[%s221 + $0x20] sm:$0xf]
        %v274 = vld [vmem:[%s221 + $0x24] sm:$0xf]
        %v275 = vld [vmem:[%s221 + $0x28] sm:$0xf]
        %v276 = vld [vmem:[%s221 + $0x2c] sm:$0xf]
        %v277 = vld [vmem:[%s221 + $0x30] sm:$0xf]
        %v278 = vld [vmem:[%s221 + $0x34] sm:$0xf]
        %v279 = vld [vmem:[%s221 + $0x38] sm:$0xf]
        %v280 = vld [vmem:[%s221 + $0x3c] sm:$0xf]
        %v281 = vld [vmem:[%s221 + $0x40] sm:$0xf]
        %v282 = vld [vmem:[%s221 + $0x44] sm:$0xf]
        %v283 = vld [vmem:[%s221 + $0x48] sm:$0xf]
        %v284 = vld [vmem:[%s221 + $0x4c] sm:$0xf]
        %v285 = vld [vmem:[%s221 + $0x50] sm:$0xf]
        %v286 = vld [vmem:[%s221 + $0x54] sm:$0xf]
        %v287 = vld [vmem:[%s221 + $0x58] sm:$0xf]
        %v288 = vld [vmem:[%s221 + $0x5c] sm:$0xf]
        %v289 = vld [vmem:[%s221 + $0x60] sm:$0xf]
        %v290 = vld [vmem:[%s221 + $0x64] sm:$0xf]
        %v291 = vld [vmem:[%s221 + $0x68] sm:$0xf]
        %v292 = vld [vmem:[%s221 + $0x6c] sm:$0xf]
        %v293 = vld [vmem:[%s221 + $0x70] sm:$0xf]
        %v294 = vld [vmem:[%s221 + $0x74] sm:$0xf]
        %v295 = vld [vmem:[%s221 + $0x78] sm:$0xf]
        %v296 = vld [vmem:[%s221 + $0x7c] sm:$0xf]
        %v297 = vld [vmem:[#allocation5] sm:$0xf]
        %v298 = vld [vmem:[#allocation5 + $0x4] sm:$0xf]
        %v299 = vld [vmem:[#allocation5 + $0x8] sm:$0xf]
        %v300 = vld [vmem:[#allocation5 + $0xc] sm:$0xf]
        %v301 = vld [vmem:[#allocation5 + $0x10] sm:$0xf]
        %v302 = vld [vmem:[#allocation5 + $0x14] sm:$0xf]
        %v303 = vld [vmem:[#allocation5 + $0x18] sm:$0xf]
        %v304 = vld [vmem:[#allocation5 + $0x1c] sm:$0xf]
        %v305 = vld [vmem:[#allocation5 + $0x20] sm:$0xf]
        %v306 = vld [vmem:[#allocation5 + $0x24] sm:$0xf]
        %v307 = vld [vmem:[#allocation5 + $0x28] sm:$0xf]
        %v308 = vld [vmem:[#allocation5 + $0x2c] sm:$0xf]
        %v309 = vld [vmem:[#allocation5 + $0x30] sm:$0xf]
        %v310 = vld [vmem:[#allocation5 + $0x34] sm:$0xf]
        %v311 = vld [vmem:[#allocation5 + $0x38] sm:$0xf]
        %v312 = vld [vmem:[#allocation5 + $0x3c] sm:$0xf]
        %v345 = vunpack.c.l.b16 %v265
        %v346 = vunpack.c.l.b16 %v266
        %v347 = vunpack.c.l.b16 %v267
        %v348 = vunpack.c.l.b16 %v268
        %v349 = vunpack.c.l.b16 %v269
        %v350 = vunpack.c.l.b16 %v270
        %v351 = vunpack.c.l.b16 %v271
        %v352 = vunpack.c.l.b16 %v272
        %v353 = vunpack.c.l.b16 %v273
        %v354 = vunpack.c.l.b16 %v274
        %v355 = vunpack.c.l.b16 %v275
        %v356 = vunpack.c.l.b16 %v276
        %v357 = vunpack.c.l.b16 %v277
        %v358 = vunpack.c.l.b16 %v278
        %v359 = vunpack.c.l.b16 %v279
        %v360 = vunpack.c.l.b16 %v280
        %v361 = vunpack.c.l.b16 %v281
        %v362 = vunpack.c.l.b16 %v282
        %v363 = vunpack.c.l.b16 %v283
        %v364 = vunpack.c.l.b16 %v284
        %v365 = vunpack.c.l.b16 %v285
        %v366 = vunpack.c.l.b16 %v286
        %v367 = vunpack.c.l.b16 %v287
        %v368 = vunpack.c.l.b16 %v288
        %v369 = vunpack.c.l.b16 %v289
        %v370 = vunpack.c.l.b16 %v290
        %v371 = vunpack.c.l.b16 %v291
        %v372 = vunpack.c.l.b16 %v292
        %v373 = vunpack.c.l.b16 %v293
        %v374 = vunpack.c.l.b16 %v294
        %v375 = vunpack.c.l.b16 %v295
        %v376 = vunpack.c.l.b16 %v296
        %v377 = vpack.c.b16 %v346, %v345
        %v378 = vpack.c.b16 %v348, %v347
        %v379 = vpack.c.b16 %v350, %v349
        %v380 = vpack.c.b16 %v352, %v351
        %v381 = vpack.c.b16 %v354, %v353
        %v382 = vpack.c.b16 %v356, %v355
        %v383 = vpack.c.b16 %v358, %v357
        %v384 = vpack.c.b16 %v360, %v359
        %v385 = vpack.c.b16 %v362, %v361
        %v386 = vpack.c.b16 %v364, %v363
        %v387 = vpack.c.b16 %v366, %v365
        %v388 = vpack.c.b16 %v368, %v367
        %v389 = vpack.c.b16 %v370, %v369
        %v390 = vpack.c.b16 %v372, %v371
        %v391 = vpack.c.b16 %v374, %v373
        %v392 = vpack.c.b16 %v376, %v375
        %v425 = vunpack.c.l.b16 %v297
        %v426 = vunpack.c.l.b16 %v298
        %v427 = vunpack.c.l.b16 %v299
        %v428 = vunpack.c.l.b16 %v300
        %v429 = vunpack.c.l.b16 %v301
        %v430 = vunpack.c.l.b16 %v302
        %v431 = vunpack.c.l.b16 %v303
        %v432 = vunpack.c.l.b16 %v304
        %v433 = vunpack.c.l.b16 %v305
        %v434 = vunpack.c.l.b16 %v306
        %v435 = vunpack.c.l.b16 %v307
        %v436 = vunpack.c.l.b16 %v308
        %v437 = vunpack.c.l.b16 %v309
        %v438 = vunpack.c.l.b16 %v310
        %v439 = vunpack.c.l.b16 %v311
        %v440 = vunpack.c.l.b16 %v312
        %v441 = vpack.c.b16 %v426, %v425
        %v442 = vpack.c.b16 %v428, %v427
        %v443 = vpack.c.b16 %v430, %v429
        %v444 = vpack.c.b16 %v432, %v431
        %v445 = vpack.c.b16 %v434, %v433
        %v446 = vpack.c.b16 %v436, %v435
        %v447 = vpack.c.b16 %v438, %v437
        %v448 = vpack.c.b16 %v440, %v439
        %457 = vmatpush.bf16.msra.mxu0 %v448
        %458 = vmatpush.bf16.msra.mxu0 %v447
        %459 = vmatpush.bf16.msra.mxu0 %v446
        %460 = vmatpush.bf16.msra.mxu0 %v445
        %461 = vmatpush.bf16.msra.mxu0 %v444
        %462 = vmatpush.bf16.msra.mxu0 %v443
        %463 = vmatpush.bf16.msra.mxu0 %v442
        %464 = vmatpush.bf16.msra.mxu0 %v441
        %465 = vmatmul.bf16.gmra.mxu0 %v377
        %v466 = vpop.f32.mrf.mxu0
        %v467 = vadd.f32 0.0, %v466
        %v468 = vpop.f32.mrf.mxu0
        %v469 = vadd.f32 0.0, %v468
        %470 = vmatmul.bf16.gmra.mxu0 %v378
        %v471 = vpop.f32.mrf.mxu0
        %v472 = vadd.f32 0.0, %v471
        %v473 = vpop.f32.mrf.mxu0
        %v474 = vadd.f32 0.0, %v473
        %475 = vmatmul.bf16.gmra.mxu0 %v379
        %v476 = vpop.f32.mrf.mxu0
        %v477 = vadd.f32 0.0, %v476
        %v478 = vpop.f32.mrf.mxu0
        %v479 = vadd.f32 0.0, %v478
        %480 = vmatmul.bf16.gmra.mxu0 %v380
        %v481 = vpop.f32.mrf.mxu0
        %v482 = vadd.f32 0.0, %v481
        %v483 = vpop.f32.mrf.mxu0
        %v484 = vadd.f32 0.0, %v483
        %485 = vmatmul.bf16.gmra.mxu0 %v381
        %v486 = vpop.f32.mrf.mxu0
        %v487 = vadd.f32 0.0, %v486
        %v488 = vpop.f32.mrf.mxu0
        %v489 = vadd.f32 0.0, %v488
        %490 = vmatmul.bf16.gmra.mxu0 %v382
        %v491 = vpop.f32.mrf.mxu0
        %v492 = vadd.f32 0.0, %v491
        %v493 = vpop.f32.mrf.mxu0
        %v494 = vadd.f32 0.0, %v493
        %495 = vmatmul.bf16.gmra.mxu0 %v383
        %v496 = vpop.f32.mrf.mxu0
        %v497 = vadd.f32 0.0, %v496
        %v498 = vpop.f32.mrf.mxu0
        %v499 = vadd.f32 0.0, %v498
        %500 = vmatmul.bf16.gmra.mxu0 %v384
        %v501 = vpop.f32.mrf.mxu0
        %v502 = vadd.f32 0.0, %v501
        %v503 = vpop.f32.mrf.mxu0
        %v504 = vadd.f32 0.0, %v503
        %505 = vmatmul.bf16.gmra.mxu0 %v385
        %v506 = vpop.f32.mrf.mxu0
        %v507 = vadd.f32 0.0, %v506
        %v508 = vpop.f32.mrf.mxu0
        %v509 = vadd.f32 0.0, %v508
        %510 = vmatmul.bf16.gmra.mxu0 %v386
        %v511 = vpop.f32.mrf.mxu0
        %v512 = vadd.f32 0.0, %v511
        %v513 = vpop.f32.mrf.mxu0
        %v514 = vadd.f32 0.0, %v513
        %515 = vmatmul.bf16.gmra.mxu0 %v387
        %v516 = vpop.f32.mrf.mxu0
        %v517 = vadd.f32 0.0, %v516
        %v518 = vpop.f32.mrf.mxu0
        %v519 = vadd.f32 0.0, %v518
        %520 = vmatmul.bf16.gmra.mxu0 %v388
        %v521 = vpop.f32.mrf.mxu0
        %v522 = vadd.f32 0.0, %v521
        %v523 = vpop.f32.mrf.mxu0
        %v524 = vadd.f32 0.0, %v523
        %525 = vmatmul.bf16.gmra.mxu0 %v389
        %v526 = vpop.f32.mrf.mxu0
        %v527 = vadd.f32 0.0, %v526
        %v528 = vpop.f32.mrf.mxu0
        %v529 = vadd.f32 0.0, %v528
        %530 = vmatmul.bf16.gmra.mxu0 %v390
        %v531 = vpop.f32.mrf.mxu0
        %v532 = vadd.f32 0.0, %v531
        %v533 = vpop.f32.mrf.mxu0
        %v534 = vadd.f32 0.0, %v533
        %535 = vmatmul.bf16.gmra.mxu0 %v391
        %v536 = vpop.f32.mrf.mxu0
        %v537 = vadd.f32 0.0, %v536
        %v538 = vpop.f32.mrf.mxu0
        %v539 = vadd.f32 0.0, %v538
        %540 = vmatmul.bf16.gmra.mxu0 %v392
        %v541 = vpop.f32.mrf.mxu0
        %v542 = vadd.f32 0.0, %v541
        %v543 = vpop.f32.mrf.mxu0
        %v544 = vadd.f32 0.0, %v543
        %545 = vdwg.mxu0
        %v546 = vpack.c.bf16 %v467, %v467
        %v547 = vpack.c.bf16 %v469, %v469
        %v548 = vpack.c.bf16 %v472, %v472
        %v549 = vpack.c.bf16 %v474, %v474
        %v550 = vpack.c.bf16 %v477, %v477
        %v551 = vpack.c.bf16 %v479, %v479
        %v552 = vpack.c.bf16 %v482, %v482
        %v553 = vpack.c.bf16 %v484, %v484
        %v554 = vpack.c.bf16 %v487, %v487
        %v555 = vpack.c.bf16 %v489, %v489
        %v556 = vpack.c.bf16 %v492, %v492
        %v557 = vpack.c.bf16 %v494, %v494
        %v558 = vpack.c.bf16 %v497, %v497
        %v559 = vpack.c.bf16 %v499, %v499
        %v560 = vpack.c.bf16 %v502, %v502
        %v561 = vpack.c.bf16 %v504, %v504
        %v562 = vpack.c.bf16 %v507, %v507
        %v563 = vpack.c.bf16 %v509, %v509
        %v564 = vpack.c.bf16 %v512, %v512
        %v565 = vpack.c.bf16 %v514, %v514
        %v566 = vpack.c.bf16 %v517, %v517
        %v567 = vpack.c.bf16 %v519, %v519
        %v568 = vpack.c.bf16 %v522, %v522
        %v569 = vpack.c.bf16 %v524, %v524
        %v570 = vpack.c.bf16 %v527, %v527
        %v571 = vpack.c.bf16 %v529, %v529
        %v572 = vpack.c.bf16 %v532, %v532
        %v573 = vpack.c.bf16 %v534, %v534
        %v574 = vpack.c.bf16 %v537, %v537
        %v575 = vpack.c.bf16 %v539, %v539
        %v576 = vpack.c.bf16 %v542, %v542
        %v577 = vpack.c.bf16 %v544, %v544
        %578 = vst [vmem:[%s254] sm:$0xf] %v546
        %579 = vst [vmem:[%s254 + $0x4] sm:$0xf] %v547
        %580 = vst [vmem:[%s254 + $0x8] sm:$0xf] %v548
        %581 = vst [vmem:[%s254 + $0xc] sm:$0xf] %v549
        %582 = vst [vmem:[%s254 + $0x10] sm:$0xf] %v550
        %583 = vst [vmem:[%s254 + $0x14] sm:$0xf] %v551
        %584 = vst [vmem:[%s254 + $0x18] sm:$0xf] %v552
        %585 = vst [vmem:[%s254 + $0x1c] sm:$0xf] %v553
        %586 = vst [vmem:[%s254 + $0x20] sm:$0xf] %v554
        %587 = vst [vmem:[%s254 + $0x24] sm:$0xf] %v555
        %588 = vst [vmem:[%s254 + $0x28] sm:$0xf] %v556
        %589 = vst [vmem:[%s254 + $0x2c] sm:$0xf] %v557
        %590 = vst [vmem:[%s254 + $0x30] sm:$0xf] %v558
        %591 = vst [vmem:[%s254 + $0x34] sm:$0xf] %v559
        %592 = vst [vmem:[%s254 + $0x38] sm:$0xf] %v560
        %593 = vst [vmem:[%s254 + $0x3c] sm:$0xf] %v561
        %594 = vst [vmem:[%s254 + $0x40] sm:$0xf] %v562
        %595 = vst [vmem:[%s254 + $0x44] sm:$0xf] %v563
        %596 = vst [vmem:[%s254 + $0x48] sm:$0xf] %v564
        %597 = vst [vmem:[%s254 + $0x4c] sm:$0xf] %v565
        %598 = vst [vmem:[%s254 + $0x50] sm:$0xf] %v566
        %599 = vst [vmem:[%s254 + $0x54] sm:$0xf] %v567
        %600 = vst [vmem:[%s254 + $0x58] sm:$0xf] %v568
        %601 = vst [vmem:[%s254 + $0x5c] sm:$0xf] %v569
        %602 = vst [vmem:[%s254 + $0x60] sm:$0xf] %v570
        %603 = vst [vmem:[%s254 + $0x64] sm:$0xf] %v571
        %604 = vst [vmem:[%s254 + $0x68] sm:$0xf] %v572
        %605 = vst [vmem:[%s254 + $0x6c] sm:$0xf] %v573
        %606 = vst [vmem:[%s254 + $0x70] sm:$0xf] %v574
        %607 = vst [vmem:[%s254 + $0x74] sm:$0xf] %v575
        %608 = vst [vmem:[%s254 + $0x78] sm:$0xf] %v576
        %609 = vst [vmem:[%s254 + $0x7c] sm:$0xf] %v577
        %v610 = vld [vmem:[#allocation7] sm:$0xf]
        %v611 = vld [vmem:[#allocation7 + $0x4] sm:$0xf]
        %v612 = vld [vmem:[#allocation7 + $0x8] sm:$0xf]
        %v613 = vld [vmem:[#allocation7 + $0xc] sm:$0xf]
        %v614 = vld [vmem:[#allocation7 + $0x10] sm:$0xf]
        %v615 = vld [vmem:[#allocation7 + $0x14] sm:$0xf]
        %v616 = vld [vmem:[#allocation7 + $0x18] sm:$0xf]
        %v617 = vld [vmem:[#allocation7 + $0x1c] sm:$0xf]
        %v618 = vld [vmem:[#allocation7 + $0x20] sm:$0xf]
        %v619 = vld [vmem:[#allocation7 + $0x24] sm:$0xf]
        %v620 = vld [vmem:[#allocation7 + $0x28] sm:$0xf]
        %v621 = vld [vmem:[#allocation7 + $0x2c] sm:$0xf]
        %v622 = vld [vmem:[#allocation7 + $0x30] sm:$0xf]
        %v623 = vld [vmem:[#allocation7 + $0x34] sm:$0xf]
        %v624 = vld [vmem:[#allocation7 + $0x38] sm:$0xf]
        %v625 = vld [vmem:[#allocation7 + $0x3c] sm:$0xf]
        %v642 = vunpack.c.l.b16 %v610
        %v643 = vunpack.c.l.b16 %v611
        %v644 = vunpack.c.l.b16 %v612
        %v645 = vunpack.c.l.b16 %v613
        %v646 = vunpack.c.l.b16 %v614
        %v647 = vunpack.c.l.b16 %v615
        %v648 = vunpack.c.l.b16 %v616
        %v649 = vunpack.c.l.b16 %v617
        %v650 = vunpack.c.l.b16 %v618
        %v651 = vunpack.c.l.b16 %v619
        %v652 = vunpack.c.l.b16 %v620
        %v653 = vunpack.c.l.b16 %v621
        %v654 = vunpack.c.l.b16 %v622
        %v655 = vunpack.c.l.b16 %v623
        %v656 = vunpack.c.l.b16 %v624
        %v657 = vunpack.c.l.b16 %v625
        %v658 = vpack.c.b16 %v643, %v642
        %v659 = vpack.c.b16 %v645, %v644
        %v660 = vpack.c.b16 %v647, %v646
        %v661 = vpack.c.b16 %v649, %v648
        %v662 = vpack.c.b16 %v651, %v650
        %v663 = vpack.c.b16 %v653, %v652
        %v664 = vpack.c.b16 %v655, %v654
        %v665 = vpack.c.b16 %v657, %v656
        %674 = vmatpush.bf16.msra.mxu0 %v665
        %675 = vmatpush.bf16.msra.mxu0 %v664
        %676 = vmatpush.bf16.msra.mxu0 %v663
        %677 = vmatpush.bf16.msra.mxu0 %v662
        %678 = vmatpush.bf16.msra.mxu0 %v661
        %679 = vmatpush.bf16.msra.mxu0 %v660
        %680 = vmatpush.bf16.msra.mxu0 %v659
        %681 = vmatpush.bf16.msra.mxu0 %v658
        %682 = vmatmul.bf16.gmra.mxu0 %v377
        %v683 = vpop.f32.mrf.mxu0
        %v684 = vadd.f32 0.0, %v683
        %v685 = vpop.f32.mrf.mxu0
        %v686 = vadd.f32 0.0, %v685
        %687 = vmatmul.bf16.gmra.mxu0 %v378
        %v688 = vpop.f32.mrf.mxu0
        %v689 = vadd.f32 0.0, %v688
        %v690 = vpop.f32.mrf.mxu0
        %v691 = vadd.f32 0.0, %v690
        %692 = vmatmul.bf16.gmra.mxu0 %v379
        %v693 = vpop.f32.mrf.mxu0
        %v694 = vadd.f32 0.0, %v693
        %v695 = vpop.f32.mrf.mxu0
        %v696 = vadd.f32 0.0, %v695
        %697 = vmatmul.bf16.gmra.mxu0 %v380
        %v698 = vpop.f32.mrf.mxu0
        %v699 = vadd.f32 0.0, %v698
        %v700 = vpop.f32.mrf.mxu0
        %v701 = vadd.f32 0.0, %v700
        %702 = vmatmul.bf16.gmra.mxu0 %v381
        %v703 = vpop.f32.mrf.mxu0
        %v704 = vadd.f32 0.0, %v703
        %v705 = vpop.f32.mrf.mxu0
        %v706 = vadd.f32 0.0, %v705
        %707 = vmatmul.bf16.gmra.mxu0 %v382
        %v708 = vpop.f32.mrf.mxu0
        %v709 = vadd.f32 0.0, %v708
        %v710 = vpop.f32.mrf.mxu0
        %v711 = vadd.f32 0.0, %v710
        %712 = vmatmul.bf16.gmra.mxu0 %v383
        %v713 = vpop.f32.mrf.mxu0
        %v714 = vadd.f32 0.0, %v713
        %v715 = vpop.f32.mrf.mxu0
        %v716 = vadd.f32 0.0, %v715
        %717 = vmatmul.bf16.gmra.mxu0 %v384
        %v718 = vpop.f32.mrf.mxu0
        %v719 = vadd.f32 0.0, %v718
        %v720 = vpop.f32.mrf.mxu0
        %v721 = vadd.f32 0.0, %v720
        %722 = vmatmul.bf16.gmra.mxu0 %v385
        %v723 = vpop.f32.mrf.mxu0
        %v724 = vadd.f32 0.0, %v723
        %v725 = vpop.f32.mrf.mxu0
        %v726 = vadd.f32 0.0, %v725
        %727 = vmatmul.bf16.gmra.mxu0 %v386
        %v728 = vpop.f32.mrf.mxu0
        %v729 = vadd.f32 0.0, %v728
        %v730 = vpop.f32.mrf.mxu0
        %v731 = vadd.f32 0.0, %v730
        %732 = vmatmul.bf16.gmra.mxu0 %v387
        %v733 = vpop.f32.mrf.mxu0
        %v734 = vadd.f32 0.0, %v733
        %v735 = vpop.f32.mrf.mxu0
        %v736 = vadd.f32 0.0, %v735
        %737 = vmatmul.bf16.gmra.mxu0 %v388
        %v738 = vpop.f32.mrf.mxu0
        %v739 = vadd.f32 0.0, %v738
        %v740 = vpop.f32.mrf.mxu0
        %v741 = vadd.f32 0.0, %v740
        %742 = vmatmul.bf16.gmra.mxu0 %v389
        %v743 = vpop.f32.mrf.mxu0
        %v744 = vadd.f32 0.0, %v743
        %v745 = vpop.f32.mrf.mxu0
        %v746 = vadd.f32 0.0, %v745
        %747 = vmatmul.bf16.gmra.mxu0 %v390
        %v748 = vpop.f32.mrf.mxu0
        %v749 = vadd.f32 0.0, %v748
        %v750 = vpop.f32.mrf.mxu0
        %v751 = vadd.f32 0.0, %v750
        %752 = vmatmul.bf16.gmra.mxu0 %v391
        %v753 = vpop.f32.mrf.mxu0
        %v754 = vadd.f32 0.0, %v753
        %v755 = vpop.f32.mrf.mxu0
        %v756 = vadd.f32 0.0, %v755
        %757 = vmatmul.bf16.gmra.mxu0 %v392
        %v758 = vpop.f32.mrf.mxu0
        %v759 = vadd.f32 0.0, %v758
        %v760 = vpop.f32.mrf.mxu0
        %v761 = vadd.f32 0.0, %v760
        %762 = vdwg.mxu0
        %v763 = vpack.c.bf16 %v684, %v684
        %v764 = vpack.c.bf16 %v686, %v686
        %v765 = vpack.c.bf16 %v689, %v689
        %v766 = vpack.c.bf16 %v691, %v691
        %v767 = vpack.c.bf16 %v694, %v694
        %v768 = vpack.c.bf16 %v696, %v696
        %v769 = vpack.c.bf16 %v699, %v699
        %v770 = vpack.c.bf16 %v701, %v701
        %v771 = vpack.c.bf16 %v704, %v704
        %v772 = vpack.c.bf16 %v706, %v706
        %v773 = vpack.c.bf16 %v709, %v709
        %v774 = vpack.c.bf16 %v711, %v711
        %v775 = vpack.c.bf16 %v714, %v714
        %v776 = vpack.c.bf16 %v716, %v716
        %v777 = vpack.c.bf16 %v719, %v719
        %v778 = vpack.c.bf16 %v721, %v721
        %v779 = vpack.c.bf16 %v724, %v724
        %v780 = vpack.c.bf16 %v726, %v726
        %v781 = vpack.c.bf16 %v729, %v729
        %v782 = vpack.c.bf16 %v731, %v731
        %v783 = vpack.c.bf16 %v734, %v734
        %v784 = vpack.c.bf16 %v736, %v736
        %v785 = vpack.c.bf16 %v739, %v739
        %v786 = vpack.c.bf16 %v741, %v741
        %v787 = vpack.c.bf16 %v744, %v744
        %v788 = vpack.c.bf16 %v746, %v746
        %v789 = vpack.c.bf16 %v749, %v749
        %v790 = vpack.c.bf16 %v751, %v751
        %v791 = vpack.c.bf16 %v754, %v754
        %v792 = vpack.c.bf16 %v756, %v756
        %v793 = vpack.c.bf16 %v759, %v759
        %v794 = vpack.c.bf16 %v761, %v761
        %795 = vst [vmem:[%s261] sm:$0xf] %v763
        %796 = vst [vmem:[%s261 + $0x4] sm:$0xf] %v764
        %797 = vst [vmem:[%s261 + $0x8] sm:$0xf] %v765
        %798 = vst [vmem:[%s261 + $0xc] sm:$0xf] %v766
        %799 = vst [vmem:[%s261 + $0x10] sm:$0xf] %v767
        %800 = vst [vmem:[%s261 + $0x14] sm:$0xf] %v768
        %801 = vst [vmem:[%s261 + $0x18] sm:$0xf] %v769
        %802 = vst [vmem:[%s261 + $0x1c] sm:$0xf] %v770
        %803 = vst [vmem:[%s261 + $0x20] sm:$0xf] %v771
        %804 = vst [vmem:[%s261 + $0x24] sm:$0xf] %v772
        %805 = vst [vmem:[%s261 + $0x28] sm:$0xf] %v773
        %806 = vst [vmem:[%s261 + $0x2c] sm:$0xf] %v774
        %807 = vst [vmem:[%s261 + $0x30] sm:$0xf] %v775
        %808 = vst [vmem:[%s261 + $0x34] sm:$0xf] %v776
        %809 = vst [vmem:[%s261 + $0x38] sm:$0xf] %v777
        %810 = vst [vmem:[%s261 + $0x3c] sm:$0xf] %v778
        %811 = vst [vmem:[%s261 + $0x40] sm:$0xf] %v779
        %812 = vst [vmem:[%s261 + $0x44] sm:$0xf] %v780
        %813 = vst [vmem:[%s261 + $0x48] sm:$0xf] %v781
        %814 = vst [vmem:[%s261 + $0x4c] sm:$0xf] %v782
        %815 = vst [vmem:[%s261 + $0x50] sm:$0xf] %v783
        %816 = vst [vmem:[%s261 + $0x54] sm:$0xf] %v784
        %817 = vst [vmem:[%s261 + $0x58] sm:$0xf] %v785
        %818 = vst [vmem:[%s261 + $0x5c] sm:$0xf] %v786
        %819 = vst [vmem:[%s261 + $0x60] sm:$0xf] %v787
        %820 = vst [vmem:[%s261 + $0x64] sm:$0xf] %v788
        %821 = vst [vmem:[%s261 + $0x68] sm:$0xf] %v789
        %822 = vst [vmem:[%s261 + $0x6c] sm:$0xf] %v790
        %823 = vst [vmem:[%s261 + $0x70] sm:$0xf] %v791
        %824 = vst [vmem:[%s261 + $0x74] sm:$0xf] %v792
        %825 = vst [vmem:[%s261 + $0x78] sm:$0xf] %v793
        %826 = vst [vmem:[%s261 + $0x7c] sm:$0xf] %v794
        %s827 = sand.u32 %s102, 1
        %s828 = scalar_lea.sflag [#allocation4], %s827
        %s829 = sand.u32 %s102, 1
        %s830 = smul.addr %s829, 128
        %s831 = scalar_lea.vmem [#allocation8], %s830
        %s832 = sand.u32 %s128, 1
        %s833 = scalar_lea.sflag [#allocation10], %s832
        %s834 = sand.u32 %s128, 1
        %s835 = smul.addr %s834, 128
        %s836 = scalar_lea.vmem [#allocation9], %s835
        // Predicated region
        $region45: #{tpu_custom_call.1} parent=31 // pred_check
          %p837 = pneg %p112
        $region46: #{tpu_custom_call.1} parent=31 // pred_check_branch
          %839 = sbr.rel (%p837) target = $region48
        $region47: #{tpu_custom_call.1} parent=31 // pred_region
          %s840 = smul.u32 32, %s26
          %842 = vsyncadd %s828, 0
          %s843 = smul.addr %s840, 4
          %s844 = scalar_lea.hbm %s3, %s843
          %s845 = sshll.u32 %s831, 4
          %s846 = int_to_ptr.vmem [resolvable:$true] %s845
          %s847 = sshll.u32 %s844, 4
          %s848 = int_to_ptr.hbm [resolvable:$true] %s847
          %853 = dma.vmem_to_hbm [thread:$0]  %s846, 2048, %s848, %s828, 64, 64, 4
        $region48: #{tpu_custom_call.1} parent=31 // pred_fallthru
          _
        // Predicated region
        $region49: #{tpu_custom_call.1} parent=31 // pred_check
          %p854 = pneg %p138
        $region50: #{tpu_custom_call.1} parent=31 // pred_check_branch
          %856 = sbr.rel (%p854) target = $region52
        $region51: #{tpu_custom_call.1} parent=31 // pred_region
          %s857 = smul.u32 32, %s26
          %859 = vsyncadd %s833, 0
          %s860 = smul.addr %s857, 4
          %s861 = scalar_lea.hbm %s4, %s860
          %s862 = sshll.u32 %s836, 4
          %s863 = int_to_ptr.vmem [resolvable:$true] %s862
          %s864 = sshll.u32 %s861, 4
          %s865 = int_to_ptr.hbm [resolvable:$true] %s864
          %870 = dma.vmem_to_hbm [thread:$0]  %s863, 2048, %s865, %s833, 64, 64, 4
        $region52: #{tpu_custom_call.1} parent=31 // pred_fallthru
          _
      $region32: #{tpu_custom_call.1} parent=5 // pred_fallthru
        _
      %p871 = scmp.le.s32.totalorder 2, %s21
      // Predicated region
      $region53: #{tpu_custom_call.1} parent=5 // pred_check
        %p872 = pneg %p871
      $region54: #{tpu_custom_call.1} parent=5 // pred_check_branch
        %874 = sbr.rel (%p872) target = $region56
      $region55: #{tpu_custom_call.1} parent=5 // pred_region
        %s875 = ssub.s32 %s21, 2
        // Predicated region
        $region57: #{tpu_custom_call.1} parent=55 // pred_check
          %p876 = pneg %p118
        $region58: #{tpu_custom_call.1} parent=55 // pred_check_branch
          %878 = sbr.rel (%p876) target = $region60
        $region59: #{tpu_custom_call.1} parent=55 // pred_region
          %s879 = sand.u32 %s103, 1
          %s880 = scalar_lea.sflag [#allocation4], %s879
          %s881 = sand.u32 %s103, 1
          %s882 = smul.addr %s881, 128
          %s883 = scalar_lea.vmem [#allocation8], %s882
          %885 = dma.done %s880, 2048
        $region60: #{tpu_custom_call.1} parent=55 // pred_fallthru
          _
        // Predicated region
        $region61: #{tpu_custom_call.1} parent=55 // pred_check
          %p886 = pneg %p144
        $region62: #{tpu_custom_call.1} parent=55 // pred_check_branch
          %888 = sbr.rel (%p886) target = $region64
        $region63: #{tpu_custom_call.1} parent=55 // pred_region
          %s889 = sand.u32 %s129, 1
          %s890 = scalar_lea.sflag [#allocation10], %s889
          %s891 = sand.u32 %s129, 1
          %s892 = smul.addr %s891, 128
          %s893 = scalar_lea.vmem [#allocation9], %s892
          %895 = dma.done %s890, 2048
        $region64: #{tpu_custom_call.1} parent=55 // pred_fallthru
          _
      $region56: #{tpu_custom_call.1} parent=5 // pred_fallthru
        _
    $region6: #{tpu_custom_call.1} parent=1 // loop_footer
      %s25 = sadd.s32 1, %s21
    $region7: #{tpu_custom_call.1} parent=1 // loop_footer_branch
      %20 = sbr.rel target = $region3
    $region8: #{tpu_custom_call.1} parent=1 // loop_exit
      _
    %896 = vsyncpa [#allocation3], 1
    %s897 = scalar_lea.sflag [#allocation3], 1
    %898 = vsyncpa %s897, 1
    %899 = vsyncpa [#allocation6], 1
    %900 = vsyncpa [#allocation4], 1
    %s901 = scalar_lea.sflag [#allocation4], 1
    %902 = vsyncpa %s901, 1
    %903 = vsyncpa [#allocation10], 1
    %s904 = scalar_lea.sflag [#allocation10], 1
    %905 = vsyncpa %s904, 1

</llo_original>
